<compile_context>
chip_gen: v7x
topology: tpu7x:2x2x1
jax: 0.10.0
libtpu: 0.0.40
codegen_flags: <defaults>
</compile_context>

<pallas_src>
import jax
import jax.numpy as jnp
from jax.experimental import pallas as pl
from jax.experimental.pallas import tpu as pltpu

HIDDEN = 312            # matches nn.Linear(312, 1)
BATCH_BLOCK_MAX = 8     # batch rows per grid step
TOK_TILE_MAX = 2048     # token tile cap (v7x-safe VMEM budget)
MIN_TOK_TILE = 256      # don't accept pathologically small divisor tiles


def _round_up(x, m):
    return -(-x // m) * m


def _choose_token_tile(n_tok):
    """Pick (tn, n_pad): prefer a tile that divides N exactly (no pad of x)."""
    if n_tok <= TOK_TILE_MAX:
        return n_tok, n_tok                     # single full-axis tile
    for tn in range(TOK_TILE_MAX, MIN_TOK_TILE - 1, -8):
        if n_tok % tn == 0:
            return tn, n_tok                    # exact multiple-of-8 divisor
    # TODO(synk): handle the ragged token tail with a sized tail tile instead of
    # this HBM-copying pad (only reached when no multiple-of-8 divisor exists).
    return TOK_TILE_MAX, _round_up(n_tok, TOK_TILE_MAX)


# ----------------------------- Pallas kernel ------------------------------ #
def _pool_classify_kernel(x_ref, m_ref, w_ref, b_ref, invn_ref, o_ref, acc_ref):
    # x_ref   : (bb, tn, H)  bf16  unmasked hidden states
    # m_ref   : (bb, tn)     bf16  attention mask (0/1)
    # w_ref   : (1, H)       f32   classifier weight (constant index -> resident)
    # b_ref   : (1, 1)       f32   classifier bias (SMEM)
    # invn_ref: (1, 1)       f32   1 / (s*w)       (SMEM)
    # o_ref   : (1, bb, 1)   f32   per-token-partition partial logits
    # acc_ref : (bb, H)      f32   masked token-sum accumulator (persists over k)
    p = pl.program_id(1)
    k = pl.program_id(2)

    @pl.when(k == 0)
    def _():
        acc_ref[...] = jnp.zeros_like(acc_ref)

    # Masked token sum on the MXU: (bb, 1, tn) @ (bb, tn, H) -> (bb, 1, H).
    # bf16 inputs straight from the DMA, f32 accumulation; replaces the VPU
    # broadcast-multiply + sublane reduce and the f32 cast of the whole tile.
    m = m_ref[...][:, None, :]                                   # (bb, 1, tn) bf16
    x = x_ref[...]                                               # (bb, tn, H) bf16
    partial = jnp.einsum("bqt,bth->bqh", m, x,
                         preferred_element_type=jnp.float32)     # (bb, 1, H) f32
    acc_ref[...] += partial[:, 0, :]

    @pl.when(k == pl.num_programs(2) - 1)
    def _():
        # 312 -> 1 head; mean denominator is the TRUE token count s*w, matching
        # PyTorch `.mean(1)` (masked positions are counted in the denominator).
        logits = jnp.sum(acc_ref[...] * w_ref[...], axis=-1, keepdims=True)  # (bb,1)
        logits = logits * invn_ref[0, 0]
        # Bias is added exactly once across the token partitions (p == 0 only).
        logits = logits + jnp.where(p == 0, b_ref[0, 0], jnp.float32(0.0))
        o_ref[...] = logits[None, :, :]


def pool_and_classify(x_flat, mask_flat, w, b):
    """x_flat: (B, N, H) bf16; mask_flat: (B, N) float; w: (1, H) f32; b: (1, 1) f32 -> (B, 1) f32."""
    batch, n_tok, hidden = x_flat.shape
    assert hidden == HIDDEN

    # ---- batch blocking -----------------------------------------------------
    if batch <= BATCH_BLOCK_MAX:
        bb, b_pad = batch, batch
    else:
        bb = BATCH_BLOCK_MAX
        b_pad = _round_up(batch, bb)

    # ---- token tiling (prefer an exact divisor: no HBM pad copy of x) --------
    tn, n_pad = _choose_token_tile(n_tok)

    pad_b, pad_n = b_pad - batch, n_pad - n_tok
    if pad_b or pad_n:
        # TODO(synk): ragged batch/token tails could use sized tail tiles instead
        # of this pad; padded positions carry mask=0 AND x=0, so they add nothing.
        x_flat = jnp.pad(x_flat, ((0, pad_b), (0, pad_n), (0, 0)))
        mask_flat = jnp.pad(mask_flat, ((0, pad_b), (0, pad_n)))

    mask_bf = mask_flat.astype(jnp.bfloat16)        # 0/1 are exact in bf16

    nb = b_pad // bb
    kt_total = n_pad // tn
    # Split the token range 2-way on a parallel axis when the batch axis cannot
    # feed both v7x TensorCores (on single-TC v5e/v6e this is just a loop).
    n_part = 2 if (nb == 1 and kt_total >= 2 and kt_total % 2 == 0) else 1
    kt = kt_total // n_part

    inv_n = jnp.full((1, 1), 1.0 / float(n_tok), dtype=jnp.float32)

    # 3-deep buffering on the big activation stream once there are enough tiles
    # (fits the 48 MiB cap on v7x; plenty of headroom on v5e/v6e).
    if kt >= 3:
        x_spec = pl.BlockSpec((bb, tn, hidden), lambda i, p, k: (i, p * kt + k, 0),
                              pipeline_mode=pl.Buffered(3))
    else:
        x_spec = pl.BlockSpec((bb, tn, hidden), lambda i, p, k: (i, p * kt + k, 0))

    out = pl.pallas_call(
        _pool_classify_kernel,
        out_shape=jax.ShapeDtypeStruct((n_part, b_pad, 1), jnp.float32),
        grid_spec=pltpu.PrefetchScalarGridSpec(
            num_scalar_prefetch=0,
            grid=(nb, n_part, kt),
            in_specs=[
                x_spec,
                pl.BlockSpec((bb, tn), lambda i, p, k: (i, p * kt + k)),
                pl.BlockSpec((1, hidden), lambda i, p, k: (0, 0)),
                pl.BlockSpec(memory_space=pltpu.MemorySpace.SMEM),   # bias
                pl.BlockSpec(memory_space=pltpu.MemorySpace.SMEM),   # inv_n
            ],
            out_specs=pl.BlockSpec((1, bb, 1), lambda i, p, k: (p, i, 0)),
            scratch_shapes=[pltpu.VMEM((bb, HIDDEN), jnp.float32)],
        ),
        compiler_params=pltpu.CompilerParams(
            dimension_semantics=("parallel", "parallel", "arbitrary"),
            vmem_limit_bytes=48 * 1024 * 1024,   # above all defaults, below v7x physical
        ),
    )(x_flat, mask_bf, w, b, inv_n)

    # Tiny (n_part, B, 1) partial-sum reduce; bias was added on partition 0 only.
    return jnp.sum(out, axis=0)[:batch]


# --------------------------- Encoder (glue, JAX) --------------------------- #
def seq_encoder(input_ids, attention_masks, embed_table):
    # TODO(synk): SeqEncoder's definition is not part of the provided module; a
    # deterministic embedding-lookup stand-in keeps the (b, s, w, 312) hidden
    # shape and per-word attentions.  Its mask-apply is fused into the Pallas
    # kernel (the kernel consumes UNmasked bf16 hidden states + the mask).
    hs = embed_table[input_ids].astype(jnp.bfloat16)             # (b, s, w, H)
    denom = jnp.clip(attention_masks.sum(-1, keepdims=True), 1, None)
    word_attns = attention_masks.astype(jnp.float32) / denom     # (b, s, w)
    return hs, word_attns


def hierarchical_net_forward(input_ids, attention_masks, params):
    b, s, w = input_ids.shape
    hidden_states, word_attns = seq_encoder(input_ids, attention_masks, params["embed"])
    flat = hidden_states.reshape(b, s * w, HIDDEN)
    mask_flat = attention_masks.reshape(b, s * w)
    outputs = pool_and_classify(flat, mask_flat, params["cls_w"], params["cls_b"])
    sentence_attns = 0
    document_vector = 0
    return outputs, word_attns, sentence_attns, document_vector


# --------------------------------- main ----------------------------------- #
if __name__ == "__main__":
    key = jax.random.PRNGKey(0)
    k_emb, k_w, k_b, k_ids, k_mask, k_ids2, k_mask2 = jax.random.split(key, 7)

    vocab = 50
    params = {
        "embed": jax.random.normal(k_emb, (vocab, HIDDEN), jnp.float32) * 0.02,
        "cls_w": jax.random.normal(k_w, (1, HIDDEN), jnp.float32) * 0.05,
        "cls_b": jax.random.normal(k_b, (1, 1), jnp.float32),
    }

    def reference(input_ids, attention_masks):
        # Pure-JAX reference for the kernelized hot path (same bf16 activations,
        # f32 math: mask -> mean over s*w (masked tokens counted) -> linear).
        b, s, w = input_ids.shape
        hs, _ = seq_encoder(input_ids, attention_masks, params["embed"])
        masked = hs.astype(jnp.float32) * attention_masks[..., None]
        flat = masked.reshape(b, s * w, HIDDEN)
        return flat.mean(axis=1) @ params["cls_w"].T + params["cls_b"][0]

    # --- small case (single token tile) ---------------------------------------
    batch, n_sent, n_word = 2, 4, 8
    input_ids = jax.random.randint(k_ids, (batch, n_sent, n_word), 0, vocab)
    attention_masks = (
        jax.random.uniform(k_mask, (batch, n_sent, n_word)) > 0.2
    ).astype(jnp.float32)

    outputs, word_attns, sent_attns, doc_vec = hierarchical_net_forward(
        input_ids, attention_masks, params)
    outputs = jax.block_until_ready(outputs)
    assert outputs.shape == (batch, 1)
    assert word_attns.shape == (batch, n_sent, n_word)
    assert sent_attns == 0 and doc_vec == 0
    ref = reference(input_ids, attention_masks)
    assert jnp.allclose(outputs, ref, atol=2e-4, rtol=2e-4), (outputs, ref)

    # --- longer case: multiple token tiles -> exercises the MXU accumulation
    #     path and the 2-way parallel token partition used for v7x dual-TC ------
    batch2, n_sent2, n_word2 = 2, 5, 512       # s*w = 2560 -> tn = 1280, 2 partitions
    input_ids2 = jax.random.randint(k_ids2, (batch2, n_sent2, n_word2), 0, vocab)
    attention_masks2 = (
        jax.random.uniform(k_mask2, (batch2, n_sent2, n_word2)) > 0.2
    ).astype(jnp.float32)

    outputs2, _, _, _ = hierarchical_net_forward(input_ids2, attention_masks2, params)
    outputs2 = jax.block_until_ready(outputs2)
    ref2 = reference(input_ids2, attention_masks2)
    assert outputs2.shape == (batch2, 1)
    assert jnp.allclose(outputs2, ref2, atol=2e-4, rtol=2e-4), (outputs2, ref2)

    print("KERNEL_OK")
</pallas_src>

<mosaic_0001>
module attributes {stable_mosaic.version = 11 : i64} {
  func.func @_pool_classify_kernel(%arg0: i32, %arg1: i32, %arg2: i32, %arg3: memref<2x32x312xbf16, #tpu.memory_space<vmem>>, %arg4: memref<2x32xbf16, #tpu.memory_space<vmem>>, %arg5: memref<1x312xf32, #tpu.memory_space<vmem>>, %arg6: memref<1x1xf32, #tpu.memory_space<smem>>, %arg7: memref<1x1xf32, #tpu.memory_space<smem>>, %arg8: memref<1x2x1xf32, #tpu.memory_space<vmem>>, %arg9: memref<2x312xf32, #tpu.memory_space<vmem>>) attributes {dimension_semantics = [#tpu.dimension_semantics<parallel>, #tpu.dimension_semantics<parallel>, #tpu.dimension_semantics<arbitrary>], iteration_bounds = array<i64: 1, 1, 1>, scalar_prefetch = 0 : i64, scratch_operands = 1 : i64, tpu.core_type = #tpu.core_type<tc>, window_params = [{transform_indices = @transform_0, window_bounds = array<i64: 2, 32, 312>}, {transform_indices = @transform_1, window_bounds = array<i64: 2, 32>}, {pipeline_mode = #tpu.pipeline_mode<synchronous>, transform_indices = @transform_2, window_bounds = array<i64: 1, 312>}, {transform_indices = @transform_3, window_bounds = array<i64: 1, 1>}, {transform_indices = @transform_4, window_bounds = array<i64: 1, 1>}, {transform_indices = @transform_5, window_bounds = array<i64: 1, 2, 1>}]} {
    %c0_i32 = arith.constant 0 : i32
    %0 = arith.cmpi eq, %arg2, %c0_i32 : i32
    %1 = arith.extui %0 : i1 to i32
    %c0_i32_0 = arith.constant 0 : i32
    %2 = arith.cmpi ne, %1, %c0_i32_0 : i32
    scf.if %2 {
      %cst_11 = arith.constant 0.000000e+00 : f32
      %14 = vector.broadcast %cst_11 : f32 to vector<2x312xf32>
      %c0_12 = arith.constant 0 : index
      %c0_13 = arith.constant 0 : index
      %15 = vector.load %arg9[%c0_12, %c0_13] : memref<2x312xf32, #tpu.memory_space<vmem>>, vector<2x312xf32>
      tpu.vector_store %arg9[%c0_12, %c0_13], %14 {strides = array<i32>} : memref<2x312xf32, #tpu.memory_space<vmem>>, vector<2x312xf32>,
    } else {
    }
    %c0 = arith.constant 0 : index
    %c0_1 = arith.constant 0 : index
    %3 = vector.load %arg4[%c0, %c0_1] : memref<2x32xbf16, #tpu.memory_space<vmem>>, vector<2x32xbf16>
    %4 = vector.shape_cast %3 : vector<2x32xbf16> to vector<2x1x32xbf16>
    %c0_2 = arith.constant 0 : index
    %c0_3 = arith.constant 0 : index
    %c0_4 = arith.constant 0 : index
    %5 = vector.load %arg3[%c0_2, %c0_3, %c0_4] : memref<2x32x312xbf16, #tpu.memory_space<vmem>>, vector<2x32x312xbf16>
    "tpu.trace_start"() <{level = 10 : i32, message = "bqt,bth->bqh"}> : () -> ()
    %cst = arith.constant dense<0.000000e+00> : vector<2x1x312xf32>
    %6 = tpu.matmul %4, %5, %cst {dimension_numbers = #tpu.dot_dimension_numbers<[2], [1], [1], [2], [0, 0, 0, 1, 1, 2], [0], [0]>} : vector<2x1x32xbf16>, vector<2x32x312xbf16>, vector<2x1x312xf32> -> vector<2x1x312xf32>
    "tpu.trace_stop"() : () -> ()
    %c0_5 = arith.constant 0 : index
    %c0_6 = arith.constant 0 : index
    %7 = vector.load %arg9[%c0_5, %c0_6] : memref<2x312xf32, #tpu.memory_space<vmem>>, vector<2x312xf32>
    %8 = vector.shape_cast %6 : vector<2x1x312xf32> to vector<2x312xf32>
    %9 = arith.addf %7, %8 : vector<2x312xf32>
    %c0_7 = arith.constant 0 : index
    %c0_8 = arith.constant 0 : index
    %10 = vector.load %arg9[%c0_7, %c0_8] : memref<2x312xf32, #tpu.memory_space<vmem>>, vector<2x312xf32>
    tpu.vector_store %arg9[%c0_7, %c0_8], %9 {strides = array<i32>} : memref<2x312xf32, #tpu.memory_space<vmem>>, vector<2x312xf32>,
    %c0_i32_9 = arith.constant 0 : i32
    %11 = arith.cmpi eq, %arg2, %c0_i32_9 : i32
    %12 = arith.extui %11 : i1 to i32
    %c0_i32_10 = arith.constant 0 : i32
    %13 = arith.cmpi ne, %12, %c0_i32_10 : i32
    scf.if %13 {
      %c0_11 = arith.constant 0 : index
      %c0_12 = arith.constant 0 : index
      %14 = vector.load %arg9[%c0_11, %c0_12] : memref<2x312xf32, #tpu.memory_space<vmem>>, vector<2x312xf32>
      %c0_13 = arith.constant 0 : index
      %c0_14 = arith.constant 0 : index
      %15 = vector.load %arg5[%c0_13, %c0_14] : memref<1x312xf32, #tpu.memory_space<vmem>>, vector<1x312xf32>
      %16 = vector.broadcast %15 : vector<1x312xf32> to vector<2x312xf32>
      %17 = arith.mulf %14, %16 : vector<2x312xf32>
      %cst_15 = arith.constant dense<0.000000e+00> : vector<2xf32>
      %18 = vector.multi_reduction <add>, %17, %cst_15 [1] : vector<2x312xf32> to vector<2xf32>
      %19 = vector.shape_cast %18 : vector<2xf32> to vector<2x1xf32>
      %c0_16 = arith.constant 0 : index
      %c0_17 = arith.constant 0 : index
      %20 = memref.load %arg7[%c0_16, %c0_17] : memref<1x1xf32, #tpu.memory_space<smem>>
      %21 = vector.broadcast %20 : f32 to vector<2x1xf32>
      %22 = arith.mulf %19, %21 : vector<2x1xf32>
      %c0_i32_18 = arith.constant 0 : i32
      %23 = arith.cmpi eq, %arg1, %c0_i32_18 : i32
      %c0_19 = arith.constant 0 : index
      %c0_20 = arith.constant 0 : index
      %24 = memref.load %arg6[%c0_19, %c0_20] : memref<1x1xf32, #tpu.memory_space<smem>>
      %cst_21 = arith.constant 0.000000e+00 : f32
      %25 = arith.select %23, %24, %cst_21 : f32
      %26 = vector.broadcast %25 : f32 to vector<2x1xf32>
      %27 = arith.addf %22, %26 : vector<2x1xf32>
      %28 = vector.shape_cast %27 : vector<2x1xf32> to vector<1x2x1xf32>
      %c0_22 = arith.constant 0 : index
      %c0_23 = arith.constant 0 : index
      %c0_24 = arith.constant 0 : index
      %29 = vector.load %arg8[%c0_22, %c0_23, %c0_24] : memref<1x2x1xf32, #tpu.memory_space<vmem>>, vector<1x2x1xf32>
      tpu.vector_store %arg8[%c0_22, %c0_23, %c0_24], %28 {strides = array<i32>} : memref<1x2x1xf32, #tpu.memory_space<vmem>>, vector<1x2x1xf32>,
    } else {
    }
    return
  }
  func.func @transform_0(%arg0: i32, %arg1: i32, %arg2: i32) -> (i32, i32, i32) {
    %c1_i32 = arith.constant 1 : i32
    %0 = arith.muli %arg1, %c1_i32 : i32
    %1 = arith.addi %0, %arg2 : i32
    %c0_i32 = arith.constant 0 : i32
    %c0_i32_0 = arith.constant 0 : i32
    return %arg0, %1, %c0_i32 : i32, i32, i32
  }
  func.func @transform_1(%arg0: i32, %arg1: i32, %arg2: i32) -> (i32, i32) {
    %c1_i32 = arith.constant 1 : i32
    %0 = arith.muli %arg1, %c1_i32 : i32
    %1 = arith.addi %0, %arg2 : i32
    %c0_i32 = arith.constant 0 : i32
    return %arg0, %1 : i32, i32
  }
  func.func @transform_2(%arg0: i32, %arg1: i32, %arg2: i32) -> (i32, i32) {
    %c0_i32 = arith.constant 0 : i32
    %c0_i32_0 = arith.constant 0 : i32
    %c0_i32_1 = arith.constant 0 : i32
    return %c0_i32, %c0_i32_0 : i32, i32
  }
  func.func @transform_3(%arg0: i32, %arg1: i32, %arg2: i32) -> (i32, i32) {
    %c0_i32 = arith.constant 0 : i32
    %c0_i32_0 = arith.constant 0 : i32
    %c0_i32_1 = arith.constant 0 : i32
    return %c0_i32, %c0_i32_0 : i32, i32
  }
  func.func @transform_4(%arg0: i32, %arg1: i32, %arg2: i32) -> (i32, i32) {
    %c0_i32 = arith.constant 0 : i32
    %c0_i32_0 = arith.constant 0 : i32
    %c0_i32_1 = arith.constant 0 : i32
    return %c0_i32, %c0_i32_0 : i32, i32
  }
  func.func @transform_5(%arg0: i32, %arg1: i32, %arg2: i32) -> (i32, i32, i32) {
    %c0_i32 = arith.constant 0 : i32
    %c0_i32_0 = arith.constant 0 : i32
    return %arg1, %arg0, %c0_i32 : i32, i32, i32
  }
}

</mosaic_0001>

<llo_original>
// kernel: tpu_custom_call.1
$region0: #{tpu_custom_call.1}
  #allocation0 [shape = 'u32[]', space=smem, size = 0x4, offset = 0x4, fixed_abs, tag = 'smem constant byte address 0x4 - core index']
  #allocation1 [shape = 'u32[144,128]{1,0:T(1,128)}', space=vmem, size = 0x12000, scoped, tag = 'internal scratch']
  #allocation2 [shape = 'f32[2,312]{1,0:T(2,128)}', space=vmem, size = 0xc00, scoped, tag = 'scratch operand']
  #allocation3 [shape = 'f32[1,1]{1,0:T(1,128)S(6)}', space=smem, size = 0x200, scoped, tag = 'scoped memory for tpu_custom_call.1']
  #allocation4 [shape = 'f32[1,1]{1,0:T(1,128)S(6)}', space=smem, size = 0x200, scoped, tag = 'scoped memory for tpu_custom_call.1']
  %s0 = inlined_call_operand.hbm [shape: bf16[2,32,312], index: 0, kind: input, shape index: {}]
  %s1 = inlined_call_operand.vmem [shape: bf16[2,32], index: 1, kind: input, shape index: {}]
  %s2 = inlined_call_operand.vmem [shape: f32[1,312], index: 2, kind: input, shape index: {}]
  %s3 = inlined_call_operand.<no memory space> [shape: f32[1,1], index: 3, kind: input, shape index: {}]
  %s4 = inlined_call_operand.<no memory space> [shape: f32[1,1], index: 4, kind: input, shape index: {}]
  %s5 = inlined_call_operand.vmem [shape: f32[1,2,1], index: 5, kind: output, shape index: {}]
  %s6 = sld [smem:[#allocation0]]
  $region42: #{tpu_custom_call.1} parent=0
    _
  %s8 = ssub.s32 1, %s6
  %s9 = scalar_select 0, %s8, %s6
  %10 = sst [smem:[#allocation3]] %s3
  %11 = sst [smem:[#allocation4]] %s4
  $region1: #{tpu_custom_call.1} parent=0
    #allocation5 [shape = 'u8[49152]{0}', space=vmem, size = 0xc000, scoped, tag = 'input window, operand 0, single buffered']
    #allocation6 [shape = 's32[1]{0}', space=sflag, size = 0x4, scoped, tag = 'scoped memory for tpu_custom_call.1']
    %12 = vsyncpa [#allocation6], 0
    // Predicated region
    $region2: #{tpu_custom_call.1} parent=1 // pred_check
      _
    $region3: #{tpu_custom_call.1} parent=1 // pred_check_branch
      %14 = sbr.rel (0) target = $region5
    $region4: #{tpu_custom_call.1} parent=1 // pred_region
      %s15 = sadd.s32 0, 0
      %s16 = smul.u32 4, %s15
      %s18 = ssub.s32 1536, 1536
      %19 = vsyncadd [#allocation6], %s18
      %s20 = smul.addr %s16, 3
      %s21 = smul.addr %s20, 64
      %s22 = scalar_lea.hbm %s0, %s21
      %s23 = sshll.u32 [#allocation5], 4
      %s24 = int_to_ptr.vmem [resolvable:$true] %s23
      %29 = dma.hbm_to_vmem [thread:$0]  %s22, 1536, %s24, [#allocation6], 192, 192, 12
    $region5: #{tpu_custom_call.1} parent=1 // pred_fallthru
      _
    // Predicated region
    $region6: #{tpu_custom_call.1} parent=1 // pred_check
      _
    $region7: #{tpu_custom_call.1} parent=1 // pred_check_branch
      %31 = sbr.rel (0) target = $region9
    $region8: #{tpu_custom_call.1} parent=1 // pred_region
      %s32 = sadd.s32 0, 0
      %p33 = scmp.lt.s32.totalorder %s32, 0
      %s34 = scalar_select %p33, %s32, 0
      %s35 = scalar_lea.vmem %s1, %s34
      %s36 = sadd.s32 0, 0
    $region9: #{tpu_custom_call.1} parent=1 // pred_fallthru
      _
    // Predicated region
    $region10: #{tpu_custom_call.1} parent=1 // pred_check
      _
    $region11: #{tpu_custom_call.1} parent=1 // pred_check_branch
      %38 = sbr.rel (0) target = $region13
    $region12: #{tpu_custom_call.1} parent=1 // pred_region
      _
    $region13: #{tpu_custom_call.1} parent=1 // pred_fallthru
      _
    // Predicated region
    $region14: #{tpu_custom_call.1} parent=1 // pred_check
      _
    $region15: #{tpu_custom_call.1} parent=1 // pred_check_branch
      %40 = sbr.rel (0) target = $region17
    $region16: #{tpu_custom_call.1} parent=1 // pred_region
      _
    $region17: #{tpu_custom_call.1} parent=1 // pred_fallthru
      _
    // Predicated region
    $region18: #{tpu_custom_call.1} parent=1 // pred_check
      _
    $region19: #{tpu_custom_call.1} parent=1 // pred_check_branch
      %42 = sbr.rel (0) target = $region21
    $region20: #{tpu_custom_call.1} parent=1 // pred_region
      _
    $region21: #{tpu_custom_call.1} parent=1 // pred_fallthru
      _
    // Predicated region
    $region22: #{tpu_custom_call.1} parent=1 // pred_check
      _
    $region23: #{tpu_custom_call.1} parent=1 // pred_check_branch
      %44 = sbr.rel (0) target = $region25
    $region24: #{tpu_custom_call.1} parent=1 // pred_region
      %45 = dma.done [#allocation6], 1536
    $region25: #{tpu_custom_call.1} parent=1 // pred_fallthru
      _
    %s46 = sadd.s32 0, 0
    %p47 = scmp.lt.s32.totalorder %s46, 0
    %s48 = scalar_select %p47, %s46, 0
    %s49 = scalar_lea.vmem %s1, %s48
    %s50 = sadd.s32 0, 0
    %s51 = smul.u32 4, %s50
    %s52 = sadd.s32 0, 0
    %p53 = scmp.lt.s32.totalorder %s52, 0
    %s54 = scalar_select %p53, %s52, 0
    %s55 = scalar_lea.vmem %s1, %s54
    %s56 = sadd.s32 0, 0
    %p58 = scmp.eq.s32.totalorder 0, 0
    // Predicated region
    $region26: #{tpu_custom_call.1} parent=1 // pred_check
      %p59 = pneg %p58
    $region27: #{tpu_custom_call.1} parent=1 // pred_check_branch
      %61 = sbr.rel (%p59) target = $region29
    $region28: #{tpu_custom_call.1} parent=1 // pred_region
      %vm62 = vcmask 1041408
      %vm63 = vcmask 1043458
      %vm64 = vmor %vm63, %vm62
      %vm65 = vcmask 455684
      %vm66 = vmor %vm65, %vm64
      %67 = vst.msk [vmem:[#allocation2] sm:$0x3f] %vm66, 0.0
    $region29: #{tpu_custom_call.1} parent=1 // pred_fallthru
      _
    %v68 = vld [vmem:[%s55] sm:$0x1]
    %v70 = vunpack.i.l.s16 %v68
    %v71 = vunpack.i.h.s16 %v68
    %v72 = vld [vmem:[#allocation5] sm:$0xff]
    %v73 = vld [vmem:[#allocation5 + $0x8] sm:$0xf]
    %v74 = vld [vmem:[#allocation5 + $0xc] sm:$0xff]
    %v75 = vld [vmem:[#allocation5 + $0x14] sm:$0xf]
    %v76 = vld [vmem:[#allocation5 + $0x18] sm:$0xff]
    %v77 = vld [vmem:[#allocation5 + $0x20] sm:$0xf]
    %v78 = vld [vmem:[#allocation5 + $0x24] sm:$0xff]
    %v79 = vld [vmem:[#allocation5 + $0x2c] sm:$0xf]
    %v80 = vld [vmem:[#allocation5 + $0x30] sm:$0xff]
    %v81 = vld [vmem:[#allocation5 + $0x38] sm:$0xf]
    %v82 = vld [vmem:[#allocation5 + $0x3c] sm:$0xff]
    %v83 = vld [vmem:[#allocation5 + $0x44] sm:$0xf]
    %v84 = vld [vmem:[#allocation5 + $0x48] sm:$0xff]
    %v85 = vld [vmem:[#allocation5 + $0x50] sm:$0xf]
    %v86 = vld [vmem:[#allocation5 + $0x54] sm:$0xff]
    %v87 = vld [vmem:[#allocation5 + $0x5c] sm:$0xf]
    %v88 = vpack.i.b16 %v70, %v70
    %v89 = vlaneseq
    %v90 = vshrl.u32 %v89, 7
    %v91 = vsub.s32 0, %v90
    %v92 = vrot.slane %v88, %v91
    %v101 = vunpack.c.l.b16 %v72
    %v102 = vunpack.c.h.b16 %v72
    %v103 = vunpack.c.l.b16 %v73
    %v104 = vunpack.c.l.b16 %v74
    %v105 = vunpack.c.h.b16 %v74
    %v106 = vunpack.c.l.b16 %v75
    %v107 = vunpack.c.l.b16 %v76
    %v108 = vunpack.c.h.b16 %v76
    %v109 = vunpack.c.l.b16 %v77
    %v110 = vunpack.c.l.b16 %v78
    %v111 = vunpack.c.h.b16 %v78
    %v112 = vunpack.c.l.b16 %v79
    %v113 = vpack.c.b16 %v104, %v101
    %v114 = vpack.c.b16 %v105, %v102
    %v115 = vpack.c.b16 %v106, %v103
    %v116 = vpack.c.b16 %v110, %v107
    %v117 = vpack.c.b16 %v111, %v108
    %v118 = vpack.c.b16 %v112, %v109
    %vm125 = vcmask 261120
    %v127 = vsel %vm125, %v92, 0
    %129 = vmatprep.subr.bf16.mxu0 %v114
    %130 = vmatpush1.bf16.msra.mxu0 %v113
    %131 = vmatprep.subr.bf16.mxu0 %v117
    %132 = vmatpush1.bf16.msra.mxu0 %v116
    %133 = vmatprep.subr.bf16.mxu0 0
    %134 = vmatpush1.bf16.msra.mxu0 0
    %135 = vmatprep.subr.bf16.mxu0 0
    %136 = vmatpush1.bf16.msra.mxu0 0
    %137 = vmatprep.subr.bf16.mxu0 0
    %138 = vmatpush1.bf16.msra.mxu0 0
    %139 = vmatprep.subr.bf16.mxu0 0
    %140 = vmatpush1.bf16.msra.mxu0 0
    %141 = vmatprep.subr.bf16.mxu0 0
    %142 = vmatpush1.bf16.msra.mxu0 0
    %143 = vmatprep.subr.bf16.mxu0 0
    %144 = vmatpush1.bf16.msra.mxu0 0
    %145 = vmatprep.subr.bf16.mxu0 0
    %146 = vmatpush1.bf16.msra.mxu0 0
    %147 = vmatprep.subr.bf16.mxu0 0
    %148 = vmatpush1.bf16.msra.mxu0 0
    %149 = vmatprep.subr.bf16.mxu0 0
    %150 = vmatpush1.bf16.msra.mxu0 0
    %151 = vmatprep.subr.bf16.mxu0 0
    %152 = vmatpush1.bf16.msra.mxu0 0
    %153 = vmatprep.subr.bf16.mxu0 0
    %154 = vmatpush1.bf16.msra.mxu0 0
    %155 = vmatprep.subr.bf16.mxu0 0
    %156 = vmatpush1.bf16.msra.mxu0 0
    %157 = vmatprep.subr.bf16.mxu0 0
    %158 = vmatpush1.bf16.msra.mxu0 0
    %159 = vmatprep.subr.bf16.mxu0 0
    %160 = vmatpush1.bf16.msra.mxu0 0
    %161 = vmatprep.mubr.bf16.mxu0 0
    %162 = vmatmul.mubr.bf16.gmra.mrb[0].mxu0 %v127
    %v163 = vpop.f32.mrb[0].mxu0
    %v164 = vadd.f32 0.0, %v163
    %v165 = vpop.f32.mrb[0].mxu0
    %v166 = vadd.f32 0.0, %v165
    %v167 = vpop.f32.mrb[0].mxu0
    %v168 = vpop.f32.mrb[0].mxu0
    %169 = vdwg.mxu0
    %170 = vmatprep.subr.bf16.mxu0 0
    %171 = vmatpush1.bf16.msra.mxu0 %v115
    %172 = vmatprep.subr.bf16.mxu0 0
    %173 = vmatpush1.bf16.msra.mxu0 %v118
    %174 = vmatprep.subr.bf16.mxu0 0
    %175 = vmatpush1.bf16.msra.mxu0 0
    %176 = vmatprep.subr.bf16.mxu0 0
    %177 = vmatpush1.bf16.msra.mxu0 0
    %178 = vmatprep.subr.bf16.mxu0 0
    %179 = vmatpush1.bf16.msra.mxu0 0
    %180 = vmatprep.subr.bf16.mxu0 0
    %181 = vmatpush1.bf16.msra.mxu0 0
    %182 = vmatprep.subr.bf16.mxu0 0
    %183 = vmatpush1.bf16.msra.mxu0 0
    %184 = vmatprep.subr.bf16.mxu0 0
    %185 = vmatpush1.bf16.msra.mxu0 0
    %186 = vmatprep.subr.bf16.mxu0 0
    %187 = vmatpush1.bf16.msra.mxu0 0
    %188 = vmatprep.subr.bf16.mxu0 0
    %189 = vmatpush1.bf16.msra.mxu0 0
    %190 = vmatprep.subr.bf16.mxu0 0
    %191 = vmatpush1.bf16.msra.mxu0 0
    %192 = vmatprep.subr.bf16.mxu0 0
    %193 = vmatpush1.bf16.msra.mxu0 0
    %194 = vmatprep.subr.bf16.mxu0 0
    %195 = vmatpush1.bf16.msra.mxu0 0
    %196 = vmatprep.subr.bf16.mxu0 0
    %197 = vmatpush1.bf16.msra.mxu0 0
    %198 = vmatprep.subr.bf16.mxu0 0
    %199 = vmatpush1.bf16.msra.mxu0 0
    %200 = vmatprep.subr.bf16.mxu0 0
    %201 = vmatpush1.bf16.msra.mxu0 0
    %202 = vmatprep.mubr.bf16.mxu0 0
    %203 = vmatmul.mubr.bf16.gmra.mrb[0].mxu0 %v127
    %v204 = vpop.f32.mrb[0].mxu0
    %v205 = vadd.f32 0.0, %v204
    %v206 = vpop.f32.mrb[0].mxu0
    %v207 = vpop.f32.mrb[0].mxu0
    %v208 = vpop.f32.mrb[0].mxu0
    %209 = vdwg.mxu0
    %v210 = vpack.i.b16 %v71, %v71
    %v211 = vlaneseq
    %v212 = vshrl.u32 %v211, 7
    %v213 = vsub.s32 0, %v212
    %v214 = vrot.slane %v210, %v213
    %v223 = vunpack.c.l.b16 %v80
    %v224 = vunpack.c.h.b16 %v80
    %v225 = vunpack.c.l.b16 %v81
    %v226 = vunpack.c.l.b16 %v82
    %v227 = vunpack.c.h.b16 %v82
    %v228 = vunpack.c.l.b16 %v83
    %v229 = vunpack.c.l.b16 %v84
    %v230 = vunpack.c.h.b16 %v84
    %v231 = vunpack.c.l.b16 %v85
    %v232 = vunpack.c.l.b16 %v86
    %v233 = vunpack.c.h.b16 %v86
    %v234 = vunpack.c.l.b16 %v87
    %v235 = vpack.c.b16 %v226, %v223
    %v236 = vpack.c.b16 %v227, %v224
    %v237 = vpack.c.b16 %v228, %v225
    %v238 = vpack.c.b16 %v232, %v229
    %v239 = vpack.c.b16 %v233, %v230
    %v240 = vpack.c.b16 %v234, %v231
    %v248 = vsel %vm125, %v214, 0
    %250 = vmatprep.subr.bf16.mxu0 %v236
    %251 = vmatpush1.bf16.msra.mxu0 %v235
    %252 = vmatprep.subr.bf16.mxu0 %v239
    %253 = vmatpush1.bf16.msra.mxu0 %v238
    %254 = vmatprep.subr.bf16.mxu0 0
    %255 = vmatpush1.bf16.msra.mxu0 0
    %256 = vmatprep.subr.bf16.mxu0 0
    %257 = vmatpush1.bf16.msra.mxu0 0
    %258 = vmatprep.subr.bf16.mxu0 0
    %259 = vmatpush1.bf16.msra.mxu0 0
    %260 = vmatprep.subr.bf16.mxu0 0
    %261 = vmatpush1.bf16.msra.mxu0 0
    %262 = vmatprep.subr.bf16.mxu0 0
    %263 = vmatpush1.bf16.msra.mxu0 0
    %264 = vmatprep.subr.bf16.mxu0 0
    %265 = vmatpush1.bf16.msra.mxu0 0
    %266 = vmatprep.subr.bf16.mxu0 0
    %267 = vmatpush1.bf16.msra.mxu0 0
    %268 = vmatprep.subr.bf16.mxu0 0
    %269 = vmatpush1.bf16.msra.mxu0 0
    %270 = vmatprep.subr.bf16.mxu0 0
    %271 = vmatpush1.bf16.msra.mxu0 0
    %272 = vmatprep.subr.bf16.mxu0 0
    %273 = vmatpush1.bf16.msra.mxu0 0
    %274 = vmatprep.subr.bf16.mxu0 0
    %275 = vmatpush1.bf16.msra.mxu0 0
    %276 = vmatprep.subr.bf16.mxu0 0
    %277 = vmatpush1.bf16.msra.mxu0 0
    %278 = vmatprep.subr.bf16.mxu0 0
    %279 = vmatpush1.bf16.msra.mxu0 0
    %280 = vmatprep.subr.bf16.mxu0 0
    %281 = vmatpush1.bf16.msra.mxu0 0
    %282 = vmatprep.mubr.bf16.mxu0 0
    %283 = vmatmul.mubr.bf16.gmra.mrb[0].mxu0 %v248
    %v284 = vpop.f32.mrb[0].mxu0
    %v285 = vadd.f32 0.0, %v284
    %v286 = vpop.f32.mrb[0].mxu0
    %v287 = vadd.f32 0.0, %v286
    %v288 = vpop.f32.mrb[0].mxu0
    %v289 = vpop.f32.mrb[0].mxu0
    %290 = vdwg.mxu0
    %291 = vmatprep.subr.bf16.mxu0 0
    %292 = vmatpush1.bf16.msra.mxu0 %v237
    %293 = vmatprep.subr.bf16.mxu0 0
    %294 = vmatpush1.bf16.msra.mxu0 %v240
    %295 = vmatprep.subr.bf16.mxu0 0
    %296 = vmatpush1.bf16.msra.mxu0 0
    %297 = vmatprep.subr.bf16.mxu0 0
    %298 = vmatpush1.bf16.msra.mxu0 0
    %299 = vmatprep.subr.bf16.mxu0 0
    %300 = vmatpush1.bf16.msra.mxu0 0
    %301 = vmatprep.subr.bf16.mxu0 0
    %302 = vmatpush1.bf16.msra.mxu0 0
    %303 = vmatprep.subr.bf16.mxu0 0
    %304 = vmatpush1.bf16.msra.mxu0 0
    %305 = vmatprep.subr.bf16.mxu0 0
    %306 = vmatpush1.bf16.msra.mxu0 0
    %307 = vmatprep.subr.bf16.mxu0 0
    %308 = vmatpush1.bf16.msra.mxu0 0
    %309 = vmatprep.subr.bf16.mxu0 0
    %310 = vmatpush1.bf16.msra.mxu0 0
    %311 = vmatprep.subr.bf16.mxu0 0
    %312 = vmatpush1.bf16.msra.mxu0 0
    %313 = vmatprep.subr.bf16.mxu0 0
    %314 = vmatpush1.bf16.msra.mxu0 0
    %315 = vmatprep.subr.bf16.mxu0 0
    %316 = vmatpush1.bf16.msra.mxu0 0
    %317 = vmatprep.subr.bf16.mxu0 0
    %318 = vmatpush1.bf16.msra.mxu0 0
    %319 = vmatprep.subr.bf16.mxu0 0
    %320 = vmatpush1.bf16.msra.mxu0 0
    %321 = vmatprep.subr.bf16.mxu0 0
    %322 = vmatpush1.bf16.msra.mxu0 0
    %323 = vmatprep.mubr.bf16.mxu0 0
    %324 = vmatmul.mubr.bf16.gmra.mrb[0].mxu0 %v248
    %v325 = vpop.f32.mrb[0].mxu0
    %v326 = vadd.f32 0.0, %v325
    %v327 = vpop.f32.mrb[0].mxu0
    %v328 = vpop.f32.mrb[0].mxu0
    %v329 = vpop.f32.mrb[0].mxu0
    %330 = vdwg.mxu0
    %v331 = vld [vmem:[#allocation2] sm:$0x3f]
    %v338 = vcombine.low %v164, %v166
    %v340 = vunpack.c.l.s4 1983009808
    %v341 = vunpack.c.0.s8 %v340
    %v342 = vlaneseq
    %v343 = vshrl.u32 %v342, 7
    %v344 = vsub.s32 %v341, %v343
    %v345 = vrot.slane %v338, %v344
    %v347 = vunpack.c.l.s4 1983009808
    %v348 = vunpack.c.0.s8 %v347
    %v349 = vlaneseq
    %v350 = vshrl.u32 %v349, 7
    %v351 = vsub.s32 %v348, %v350
    %v352 = vrot.slane %v205, %v351
    %v353 = vcombine.low %v345, %v352
    %v354 = vcombine.low %v285, %v287
    %v356 = vunpack.c.l.s4 1983009808
    %v357 = vunpack.c.0.s8 %v356
    %v358 = vlaneseq
    %v359 = vshrl.u32 %v358, 7
    %v360 = vsub.s32 %v357, %v359
    %v361 = vrot.slane %v354, %v360
    %v363 = vunpack.c.l.s4 1983009808
    %v364 = vunpack.c.0.s8 %v363
    %v365 = vlaneseq
    %v366 = vshrl.u32 %v365, 7
    %v367 = vsub.s32 %v364, %v366
    %v368 = vrot.slane %v326, %v367
    %v369 = vcombine.low %v361, %v368
    %vm370 = vcmask 1044484
    %v371 = vsel %vm370, %v353, %v353
    %vm372 = vcmask 1046534
    %v373 = vsel %vm372, %v353, %v371
    %v374 = vrot.slane %v369, 7
    %vm375 = vcmask 1041409
    %v376 = vsel %vm375, %v374, %v373
    %vm377 = vcmask 1043459
    %v378 = vsel %vm377, %v374, %v376
    %vm379 = vcmask 1045509
    %v380 = vsel %vm379, %v374, %v378
    %vm381 = vcmask 1047559
    %v382 = vsel %vm381, %v374, %v380
    %v384 = vadd.f32 %v331, %v382
    %vm385 = vcmask 1041408
    %vm386 = vcmask 1043458
    %vm387 = vmor %vm386, %vm385
    %vm388 = vcmask 455684
    %vm389 = vmor %vm388, %vm387
    %390 = vst.msk [vmem:[#allocation2] sm:$0x3f] %vm389, %v384
    // Predicated region
    $region30: #{tpu_custom_call.1} parent=1 // pred_check
      %p391 = pneg %p58
    $region31: #{tpu_custom_call.1} parent=1 // pred_check_branch
      %393 = sbr.rel (%p391) target = $region33
    $region32: #{tpu_custom_call.1} parent=1 // pred_region
      %v394 = vld [vmem:[#allocation2] sm:$0x3f]
      %v395 = vld [vmem:[%s2] sm:$0x7]
      %v397 = vlaneseq
      %v398 = vshrl.u32 %v397, 7
      %v399 = vsub.s32 0, %v398
      %v400 = vrot.slane %v395, %v399
      %v401 = vlaneseq
      %v402 = vshrl.u32 %v401, 7
      %v403 = vsub.s32 1, %v402
      %v404 = vrot.slane %v395, %v403
      %v405 = vlaneseq
      %v406 = vshrl.u32 %v405, 7
      %v407 = vsub.s32 2, %v406
      %v408 = vrot.slane %v395, %v407
      %v409 = vcombine.low %v400, %v404
      %v411 = vunpack.c.l.s4 1983009808
      %v412 = vunpack.c.0.s8 %v411
      %v413 = vlaneseq
      %v414 = vshrl.u32 %v413, 7
      %v415 = vsub.s32 %v412, %v414
      %v416 = vrot.slane %v409, %v415
      %v418 = vunpack.c.l.s4 1983009808
      %v419 = vunpack.c.0.s8 %v418
      %v420 = vlaneseq
      %v421 = vshrl.u32 %v420, 7
      %v422 = vsub.s32 %v419, %v421
      %v423 = vrot.slane %v408, %v422
      %v424 = vcombine.low %v416, %v423
      %v426 = vmul.f32 %v394, %v424
      %v428 = vcombine.high %v426, %v426
      %v430 = vunpack.c.l.s4 1983009808
      %v431 = vunpack.c.0.s8 %v430
      %v432 = vlaneseq
      %v433 = vshrl.u32 %v432, 7
      %v434 = vsub.s32 %v431, %v433
      %v435 = vrot.slane %v426, %v434
      %v437 = vunpack.c.l.s4 1983009808
      %v438 = vunpack.c.0.s8 %v437
      %v439 = vlaneseq
      %v440 = vshrl.u32 %v439, 7
      %v441 = vsub.s32 %v438, %v440
      %v442 = vrot.slane %v428, %v441
      %v443 = vcombine.high %v435, %v435
      %v447 = vsel %vm385, %v435, 0.0
      %v448 = vsel %vm385, %v443, 0.0
      %v449 = vadd.f32 %v447, %v448
      %vm450 = vcmask 451584
      %v451 = vsel %vm450, %v442, 0.0
      %v452 = vadd.f32 %v449, %v451
      %453 = vadd.xlane.f32.xlu0 %v452
      %v454 = vpop.xlane.xlu0 %453
      %s455 = sld [smem:[#allocation4]]
      %v456 = vstv %s455
      %v457 = vmul.f32 %v454, %v456
      %p458 = scmp.eq.s32.totalorder 0, 0
      %s459 = sld [smem:[#allocation3]]
      %s460 = scalar_select %p458, %s459, 0.0
      %v461 = vstv %s460
      %v462 = vadd.f32 %v457, %v461
      %vm463 = vcmask 1024
      %464 = vst.msk [vmem:[%s5] sm:$0x3] %vm463, %v462
    $region33: #{tpu_custom_call.1} parent=1 // pred_fallthru
      _
    // Predicated region
    $region34: #{tpu_custom_call.1} parent=1 // pred_check
      _
    $region35: #{tpu_custom_call.1} parent=1 // pred_check_branch
      %466 = sbr.rel (0) target = $region37
    $region36: #{tpu_custom_call.1} parent=1 // pred_region
      _
    $region37: #{tpu_custom_call.1} parent=1 // pred_fallthru
      _
    // Predicated region
    $region38: #{tpu_custom_call.1} parent=1 // pred_check
      _
    $region39: #{tpu_custom_call.1} parent=1 // pred_check_branch
      %468 = sbr.rel (0) target = $region41
    $region40: #{tpu_custom_call.1} parent=1 // pred_region
      _
    $region41: #{tpu_custom_call.1} parent=1 // pred_fallthru
      _
    %469 = vsyncpa [#allocation6], 1

</llo_original>
